<compile_context>
chip_gen: v7x
topology: tpu7x:2x2x1
jax: 0.10.0
libtpu: 0.0.40
codegen_flags: <defaults>
</compile_context>

<pallas_src>
import functools

import jax
import jax.numpy as jnp
from jax.experimental import pallas as pl
from jax.experimental.pallas import tpu as pltpu


def _round_up(x, m):
    return (x + m - 1) // m * m


def _chunk_plan(tp, sub):
    """Static (start, size) lane sub-chunks covering [0, tp); sizes mult. of 128."""
    chunks, off = [], 0
    while off < tp:
        size = min(sub, tp - off)
        chunks.append((off, size))
        off += size
    return tuple(chunks)


def _deform_gemm_kernel(chunks, cin, v00_ref, v01_ref, v10_ref, v11_ref,
                        lx_ref, ly_ref, wmat_ref, bias_ref, out_ref):
    """One (batch, pixel-tile) step: bilinear combine + single MXU GEMM.

    Ref shapes: v*_ref (CK, TP) bf16, l*_ref (K, TP) bf16,
                wmat_ref (Cout, CK) bf16, bias_ref (Cout, 1) f32,
                out_ref (Cout, TP) f32.
    """
    wmat = wmat_ref[...]                      # (Cout, CK) bf16, tile-resident
    bias = bias_ref[...]                      # (Cout, 1)  f32

    def rep(w):                               # (K, sub) -> (CK, sub), C_in-major
        return jnp.concatenate([w] * cin, axis=0)

    # Static sub-chunk loop over the lane (pixel) axis keeps vreg pressure
    # bounded at large TP while the DMA granularity stays the full TP block.
    for start, size in chunks:
        sl = pl.ds(start, size)
        lx = lx_ref[:, sl].astype(jnp.float32)     # (K, sub)
        ly = ly_ref[:, sl].astype(jnp.float32)
        hx = 1.0 - lx
        hy = 1.0 - ly
        # Bilinear combine in f32 (portable: v5e has no bf16 VALU); corner
        # values are bf16, zero-padding already folded into them.
        cols = (rep(hy * hx) * v00_ref[:, sl].astype(jnp.float32) +
                rep(hy * lx) * v01_ref[:, sl].astype(jnp.float32) +
                rep(ly * hx) * v10_ref[:, sl].astype(jnp.float32) +
                rep(ly * lx) * v11_ref[:, sl].astype(jnp.float32))
        # Single MXU GEMM: bf16 operands (native rate), f32 accumulation.
        acc = jnp.dot(wmat, cols.astype(jnp.bfloat16),
                      preferred_element_type=jnp.float32)
        out_ref[:, sl] = acc + bias                # (Cout, 1) broadcasts


def _build_corners(rgb, offsets, kH, kW, stride, padding, dilation):
    """JAX glue: sampling coords + gathered bilinear corner values.

    Returns:
      (v00, v01, v10, v11): corner values, each (N, C_in, K, P) bf16,
                            zeroed where the corner falls outside the image.
      (lx, ly): bilinear fractions, each (N, K, P) f32.
      (H_out, W_out)
    """
    N, Cin, H, W = rgb.shape
    sH, sW = stride
    pH, pW = padding
    dH, dW = dilation
    K = kH * kW
    Hout = (H + 2 * pH - dH * (kH - 1) - 1) // sH + 1
    Wout = (W + 2 * pW - dW * (kW - 1) - 1) // sW + 1
    P = Hout * Wout

    # Base (un-deformed) sampling grid, laid out (K, P): no big transposes.
    py = jnp.repeat(jnp.arange(Hout, dtype=jnp.float32), Wout)   # (P,)
    px = jnp.tile(jnp.arange(Wout, dtype=jnp.float32), Hout)     # (P,)
    ki = jnp.repeat(jnp.arange(kH, dtype=jnp.float32), kW)       # (K,) tap row
    kj = jnp.tile(jnp.arange(kW, dtype=jnp.float32), kH)         # (K,) tap col
    base_y = py[None, :] * sH - pH + ki[:, None] * dH            # (K, P)
    base_x = px[None, :] * sW - pW + kj[:, None] * dW            # (K, P)

    # offsets channel order: [dy_k0, dx_k0, dy_k1, dx_k1, ...], k = i*kW + j
    # (torchvision deform_conv2d layout).
    off = offsets.astype(jnp.float32)
    off_y = off[:, 0::2].reshape(N, K, P)                        # (N, K, P)
    off_x = off[:, 1::2].reshape(N, K, P)

    y = base_y[None] + off_y                                     # (N, K, P)
    x = base_x[None] + off_x

    y0 = jnp.floor(y)
    x0 = jnp.floor(x)
    ly = y - y0
    lx = x - x0
    y0i = y0.astype(jnp.int32)
    x0i = x0.astype(jnp.int32)
    y1i = y0i + 1
    x1i = x0i + 1

    # Gather directly in bf16 so the narrow-cast fuses with the gather.
    rgb_flat = rgb.reshape(N, Cin, H * W).astype(jnp.bfloat16)

    def corner(yc, xc):
        valid = (yc >= 0) & (yc < H) & (xc >= 0) & (xc < W)      # (N, K, P)
        idx = jnp.clip(yc, 0, H - 1) * W + jnp.clip(xc, 0, W - 1)
        # vals[n, c, k, p] = rgb_flat[n, c, idx[n, k, p]]
        vals = jax.vmap(lambda f, i: jnp.take(f, i, axis=1))(rgb_flat, idx)
        # Fold zero-padding semantics into the values (stays bf16).
        return jnp.where(valid[:, None, :, :], vals, 0.0)        # (N, Cin, K, P)

    v00 = corner(y0i, x0i)
    v01 = corner(y0i, x1i)
    v10 = corner(y1i, x0i)
    v11 = corner(y1i, x1i)
    return (v00, v01, v10, v11), (lx, ly), (Hout, Wout)


@functools.partial(jax.jit, static_argnames=("stride", "padding", "dilation"))
def deform_conv2d_pallas(rgb, offsets, weight, bias,
                         stride=(1, 1), padding=(0, 0), dilation=(1, 1)):
    """DeformByDepthConv2d.forward: deform_conv2d(rgb, weight, offsets, bias)."""
    N, Cin, H, W = rgb.shape
    Cout, Cin_w, kH, kW = weight.shape
    assert Cin_w == Cin, "groups != 1 not supported"
    K = kH * kW
    CK = Cin * K
    assert offsets.shape[1] == 2 * K, "deformable_groups != 1 not supported"

    (v00, v01, v10, v11), (lx, ly), (Hout, Wout) = _build_corners(
        rgb, offsets, kH, kW, stride, padding, dilation)
    P = Hout * Wout

    # Flatten (Cin, K) -> CK so the kernel runs a single 2-D GEMM per tile.
    # Reshape of contiguous gather output: free at the XLA level.
    v00, v01, v10, v11 = (v.reshape(N, CK, P) for v in (v00, v01, v10, v11))
    # bf16 fractions halve their HBM read; upcast once per tile in-kernel.
    lx = lx.astype(jnp.bfloat16)
    ly = ly.astype(jnp.bfloat16)

    # (Cout, CK) bf16 weight matches the C_in-major / K-minor column ordering.
    wmat = weight.reshape(Cout, CK).astype(jnp.bfloat16)
    bias2 = bias.reshape(Cout, 1).astype(jnp.float32)

    # Pixel-tile: multiple of 128 lanes, capped at 2048. Per-tile VMEM
    # (double-buffered corners + fracs + output) stays ~1.5 MiB, far under the
    # 32 MiB scoped default on every generation (incl. v7x's 64 MiB physical).
    TP = min(2048, _round_up(P, 128))
    chunks = _chunk_plan(TP, 256)          # in-kernel 256-lane sub-chunks
    grid = (N, pl.cdiv(P, TP))             # ragged last block handled by Pallas

    val_spec = pl.BlockSpec((None, CK, TP), lambda n, p: (n, 0, p))
    frac_spec = pl.BlockSpec((None, K, TP), lambda n, p: (n, 0, p))

    bytes_in = (4 * N * CK * P) * 2 + (2 * N * K * P) * 2 \
        + wmat.size * 2 + bias2.size * 4
    bytes_out = N * Cout * P * 4
    cost = pl.CostEstimate(
        flops=int(2 * N * P * CK * Cout + 8 * N * P * CK),
        transcendentals=0,
        bytes_accessed=int(bytes_in + bytes_out))

    kernel = functools.partial(_deform_gemm_kernel, chunks, Cin)

    out = pl.pallas_call(
        kernel,
        out_shape=jax.ShapeDtypeStruct((N, Cout, P), jnp.float32),
        grid=grid,
        in_specs=[val_spec, val_spec, val_spec, val_spec,
                  frac_spec, frac_spec,
                  pl.BlockSpec((Cout, CK), lambda n, p: (0, 0)),
                  pl.BlockSpec((Cout, 1), lambda n, p: (0, 0))],
        out_specs=pl.BlockSpec((None, Cout, TP), lambda n, p: (n, 0, p)),
        compiler_params=pltpu.CompilerParams(
            dimension_semantics=("parallel", "parallel")),
        cost_estimate=cost,
    )(v00, v01, v10, v11, lx, ly, wmat, bias2)

    # (N, C_out, P) is already pixel-minor: reshape straight to NCHW.
    return out.reshape(N, Cout, Hout, Wout)


def _deform_conv2d_ref(rgb, offsets, weight, bias, stride, padding, dilation):
    """Pure-JAX reference: same bf16 corner gather, f32 combine + einsum."""
    N, Cin, _, _ = rgb.shape
    Cout, _, kH, kW = weight.shape
    K = kH * kW
    (v00, v01, v10, v11), (lx, ly), (Hout, Wout) = _build_corners(
        rgb, offsets, kH, kW, stride, padding, dilation)
    hx = 1.0 - lx
    hy = 1.0 - ly
    cols = ((hy * hx)[:, None] * v00 + (hy * lx)[:, None] * v01 +
            (ly * hx)[:, None] * v10 + (ly * lx)[:, None] * v11)   # (N,Cin,K,P) f32
    wmat = weight.reshape(Cout, Cin, K).astype(jnp.float32)
    out = jnp.einsum("nckp,ock->nop", cols, wmat) + bias[None, :, None]
    return out.reshape(N, Cout, Hout, Wout)


if __name__ == "__main__":
    # Module config (synthetic, deterministic init — no checkpoint loading).
    N, Cin, H, W = 2, 4, 16, 16
    Cout, kH, kW = 8, 3, 3
    stride, padding, dilation = (1, 1), (1, 1), (1, 1)
    Hout = (H + 2 * padding[0] - dilation[0] * (kH - 1) - 1) // stride[0] + 1
    Wout = (W + 2 * padding[1] - dilation[1] * (kW - 1) - 1) // stride[1] + 1

    key = jax.random.PRNGKey(0)
    k_rgb, k_off, k_w = jax.random.split(key, 3)

    rgb = jax.random.normal(k_rgb, (N, Cin, H, W), jnp.float32)
    offsets = 2.0 * jax.random.normal(k_off, (N, 2 * kH * kW, Hout, Wout),
                                      jnp.float32)

    # xavier_uniform_ on weight: U(-b, b), b = sqrt(6 / (fan_in + fan_out))
    fan_in = Cin * kH * kW
    fan_out = Cout * kH * kW
    bound = (6.0 / (fan_in + fan_out)) ** 0.5
    weight = jax.random.uniform(k_w, (Cout, Cin, kH, kW), jnp.float32,
                                -bound, bound)
    bias = jnp.zeros((Cout,), jnp.float32)

    out = deform_conv2d_pallas(rgb, offsets, weight, bias,
                               stride=stride, padding=padding,
                               dilation=dilation)
    out = jax.block_until_ready(out)
    assert out.shape == (N, Cout, Hout, Wout), out.shape

    ref = _deform_conv2d_ref(rgb, offsets, weight, bias,
                             stride, padding, dilation)
    max_err = float(jnp.max(jnp.abs(out - ref)))
    # Kernel path uses bf16 fractions + bf16 GEMM operands (f32 accumulation);
    # the shared bf16 corner gather cancels in the comparison. Tolerance is
    # set to the bf16-operand error bound for unit-scale inputs.
    assert jnp.allclose(out, ref, atol=5e-2, rtol=5e-2), max_err

    print("KERNEL_OK")
</pallas_src>

<mosaic_0001>
module attributes {stable_mosaic.version = 11 : i64} {
  func.func @_deform_gemm_kernel(%arg0: i32, %arg1: i32, %arg2: memref<1x36x256xbf16, #tpu.memory_space<vmem>>, %arg3: memref<1x36x256xbf16, #tpu.memory_space<vmem>>, %arg4: memref<1x36x256xbf16, #tpu.memory_space<vmem>>, %arg5: memref<1x36x256xbf16, #tpu.memory_space<vmem>>, %arg6: memref<1x9x256xbf16, #tpu.memory_space<vmem>>, %arg7: memref<1x9x256xbf16, #tpu.memory_space<vmem>>, %arg8: memref<8x36xbf16, #tpu.memory_space<vmem>>, %arg9: memref<8x1xf32, #tpu.memory_space<vmem>>, %arg10: memref<1x8x256xf32, #tpu.memory_space<vmem>>) attributes {dimension_semantics = [#tpu.dimension_semantics<parallel>, #tpu.dimension_semantics<parallel>], iteration_bounds = array<i64: 2, 1>, scalar_prefetch = 0 : i64, scratch_operands = 0 : i64, tpu.core_type = #tpu.core_type<tc>, window_params = [{transform_indices = @transform_0, window_bounds = array<i64: 1, 36, 256>}, {transform_indices = @transform_1, window_bounds = array<i64: 1, 36, 256>}, {transform_indices = @transform_2, window_bounds = array<i64: 1, 36, 256>}, {transform_indices = @transform_3, window_bounds = array<i64: 1, 36, 256>}, {transform_indices = @transform_4, window_bounds = array<i64: 1, 9, 256>}, {transform_indices = @transform_5, window_bounds = array<i64: 1, 9, 256>}, {pipeline_mode = #tpu.pipeline_mode<synchronous>, transform_indices = @transform_6, window_bounds = array<i64: 8, 36>}, {pipeline_mode = #tpu.pipeline_mode<synchronous>, transform_indices = @transform_7, window_bounds = array<i64: 8, 1>}, {transform_indices = @transform_8, window_bounds = array<i64: 1, 8, 256>}]} {
    %c0 = arith.constant 0 : index
    %c0_0 = arith.constant 0 : index
    %0 = vector.load %arg8[%c0, %c0_0] : memref<8x36xbf16, #tpu.memory_space<vmem>>, vector<8x36xbf16>
    %c0_1 = arith.constant 0 : index
    %c0_2 = arith.constant 0 : index
    %1 = vector.load %arg9[%c0_1, %c0_2] : memref<8x1xf32, #tpu.memory_space<vmem>>, vector<8x1xf32>
    %c0_3 = arith.constant 0 : index
    %c0_4 = arith.constant 0 : index
    %c0_5 = arith.constant 0 : index
    %2 = vector.load %arg6[%c0_3, %c0_4, %c0_5] : memref<1x9x256xbf16, #tpu.memory_space<vmem>>, vector<1x9x256xbf16>
    %3 = vector.shape_cast %2 : vector<1x9x256xbf16> to vector<9x256xbf16>
    %4 = arith.extf %3 : vector<9x256xbf16> to vector<9x256xf32>
    %c0_6 = arith.constant 0 : index
    %c0_7 = arith.constant 0 : index
    %c0_8 = arith.constant 0 : index
    %5 = vector.load %arg7[%c0_6, %c0_7, %c0_8] : memref<1x9x256xbf16, #tpu.memory_space<vmem>>, vector<1x9x256xbf16>
    %6 = vector.shape_cast %5 : vector<1x9x256xbf16> to vector<9x256xbf16>
    %7 = arith.extf %6 : vector<9x256xbf16> to vector<9x256xf32>
    %cst = arith.constant 1.000000e+00 : f32
    %8 = vector.broadcast %cst : f32 to vector<9x256xf32>
    %9 = arith.subf %8, %4 : vector<9x256xf32>
    %cst_9 = arith.constant 1.000000e+00 : f32
    %10 = vector.broadcast %cst_9 : f32 to vector<9x256xf32>
    %11 = arith.subf %10, %7 : vector<9x256xf32>
    %12 = arith.mulf %11, %9 : vector<9x256xf32>
    %13 = tpu.concatenate %12, %12, %12, %12 in 0 : vector<9x256xf32>, vector<9x256xf32>, vector<9x256xf32>, vector<9x256xf32> -> vector<36x256xf32>
    %c0_10 = arith.constant 0 : index
    %c0_11 = arith.constant 0 : index
    %c0_12 = arith.constant 0 : index
    %14 = vector.load %arg2[%c0_10, %c0_11, %c0_12] : memref<1x36x256xbf16, #tpu.memory_space<vmem>>, vector<1x36x256xbf16>
    %15 = vector.shape_cast %14 : vector<1x36x256xbf16> to vector<36x256xbf16>
    %16 = arith.extf %15 : vector<36x256xbf16> to vector<36x256xf32>
    %17 = arith.mulf %13, %16 : vector<36x256xf32>
    %18 = arith.mulf %11, %4 : vector<9x256xf32>
    %19 = tpu.concatenate %18, %18, %18, %18 in 0 : vector<9x256xf32>, vector<9x256xf32>, vector<9x256xf32>, vector<9x256xf32> -> vector<36x256xf32>
    %c0_13 = arith.constant 0 : index
    %c0_14 = arith.constant 0 : index
    %c0_15 = arith.constant 0 : index
    %20 = vector.load %arg3[%c0_13, %c0_14, %c0_15] : memref<1x36x256xbf16, #tpu.memory_space<vmem>>, vector<1x36x256xbf16>
    %21 = vector.shape_cast %20 : vector<1x36x256xbf16> to vector<36x256xbf16>
    %22 = arith.extf %21 : vector<36x256xbf16> to vector<36x256xf32>
    %23 = arith.mulf %19, %22 : vector<36x256xf32>
    %24 = arith.addf %17, %23 : vector<36x256xf32>
    %25 = arith.mulf %7, %9 : vector<9x256xf32>
    %26 = tpu.concatenate %25, %25, %25, %25 in 0 : vector<9x256xf32>, vector<9x256xf32>, vector<9x256xf32>, vector<9x256xf32> -> vector<36x256xf32>
    %c0_16 = arith.constant 0 : index
    %c0_17 = arith.constant 0 : index
    %c0_18 = arith.constant 0 : index
    %27 = vector.load %arg4[%c0_16, %c0_17, %c0_18] : memref<1x36x256xbf16, #tpu.memory_space<vmem>>, vector<1x36x256xbf16>
    %28 = vector.shape_cast %27 : vector<1x36x256xbf16> to vector<36x256xbf16>
    %29 = arith.extf %28 : vector<36x256xbf16> to vector<36x256xf32>
    %30 = arith.mulf %26, %29 : vector<36x256xf32>
    %31 = arith.addf %24, %30 : vector<36x256xf32>
    %32 = arith.mulf %7, %4 : vector<9x256xf32>
    %33 = tpu.concatenate %32, %32, %32, %32 in 0 : vector<9x256xf32>, vector<9x256xf32>, vector<9x256xf32>, vector<9x256xf32> -> vector<36x256xf32>
    %c0_19 = arith.constant 0 : index
    %c0_20 = arith.constant 0 : index
    %c0_21 = arith.constant 0 : index
    %34 = vector.load %arg5[%c0_19, %c0_20, %c0_21] : memref<1x36x256xbf16, #tpu.memory_space<vmem>>, vector<1x36x256xbf16>
    %35 = vector.shape_cast %34 : vector<1x36x256xbf16> to vector<36x256xbf16>
    %36 = arith.extf %35 : vector<36x256xbf16> to vector<36x256xf32>
    %37 = arith.mulf %33, %36 : vector<36x256xf32>
    %38 = arith.addf %31, %37 : vector<36x256xf32>
    %39 = arith.truncf %38 : vector<36x256xf32> to vector<36x256xbf16>
    %cst_22 = arith.constant dense<0.000000e+00> : vector<8x256xf32>
    %40 = tpu.matmul %0, %39, %cst_22 {dimension_numbers = #tpu.dot_dimension_numbers<[1], [0], [0], [1], [0, 0, 1, 1], [], []>} : vector<8x36xbf16>, vector<36x256xbf16>, vector<8x256xf32> -> vector<8x256xf32>
    %41 = vector.broadcast %1 : vector<8x1xf32> to vector<8x256xf32>
    %42 = arith.addf %40, %41 : vector<8x256xf32>
    %c0_23 = arith.constant 0 : index
    %c0_24 = arith.constant 0 : index
    %c0_25 = arith.constant 0 : index
    %43 = vector.load %arg10[%c0_23, %c0_24, %c0_25] : memref<1x8x256xf32, #tpu.memory_space<vmem>>, vector<1x8x256xf32>
    %44 = vector.shape_cast %43 : vector<1x8x256xf32> to vector<8x256xf32>
    %45 = vector.shape_cast %42 : vector<8x256xf32> to vector<1x8x256xf32>
    tpu.vector_store %arg10[%c0_23, %c0_24, %c0_25], %45 {strides = array<i32>} : memref<1x8x256xf32, #tpu.memory_space<vmem>>, vector<1x8x256xf32>,
    return
  }
  func.func @transform_0(%arg0: i32, %arg1: i32) -> (i32, i32, i32) {
    %c0_i32 = arith.constant 0 : i32
    %c0_i32_0 = arith.constant 0 : i32
    return %arg0, %c0_i32, %arg1 : i32, i32, i32
  }
  func.func @transform_1(%arg0: i32, %arg1: i32) -> (i32, i32, i32) {
    %c0_i32 = arith.constant 0 : i32
    %c0_i32_0 = arith.constant 0 : i32
    return %arg0, %c0_i32, %arg1 : i32, i32, i32
  }
  func.func @transform_2(%arg0: i32, %arg1: i32) -> (i32, i32, i32) {
    %c0_i32 = arith.constant 0 : i32
    %c0_i32_0 = arith.constant 0 : i32
    return %arg0, %c0_i32, %arg1 : i32, i32, i32
  }
  func.func @transform_3(%arg0: i32, %arg1: i32) -> (i32, i32, i32) {
    %c0_i32 = arith.constant 0 : i32
    %c0_i32_0 = arith.constant 0 : i32
    return %arg0, %c0_i32, %arg1 : i32, i32, i32
  }
  func.func @transform_4(%arg0: i32, %arg1: i32) -> (i32, i32, i32) {
    %c0_i32 = arith.constant 0 : i32
    %c0_i32_0 = arith.constant 0 : i32
    return %arg0, %c0_i32, %arg1 : i32, i32, i32
  }
  func.func @transform_5(%arg0: i32, %arg1: i32) -> (i32, i32, i32) {
    %c0_i32 = arith.constant 0 : i32
    %c0_i32_0 = arith.constant 0 : i32
    return %arg0, %c0_i32, %arg1 : i32, i32, i32
  }
  func.func @transform_6(%arg0: i32, %arg1: i32) -> (i32, i32) {
    %c0_i32 = arith.constant 0 : i32
    %c0_i32_0 = arith.constant 0 : i32
    %c0_i32_1 = arith.constant 0 : i32
    return %c0_i32, %c0_i32_0 : i32, i32
  }
  func.func @transform_7(%arg0: i32, %arg1: i32) -> (i32, i32) {
    %c0_i32 = arith.constant 0 : i32
    %c0_i32_0 = arith.constant 0 : i32
    %c0_i32_1 = arith.constant 0 : i32
    return %c0_i32, %c0_i32_0 : i32, i32
  }
  func.func @transform_8(%arg0: i32, %arg1: i32) -> (i32, i32, i32) {
    %c0_i32 = arith.constant 0 : i32
    %c0_i32_0 = arith.constant 0 : i32
    return %arg0, %c0_i32, %arg1 : i32, i32, i32
  }
}

</mosaic_0001>

<llo_original>
// kernel: deform_conv2d_pallas.1
$region0: #{deform_conv2d_pallas.1}
  #allocation0 [shape = 'u32[]', space=smem, size = 0x4, offset = 0x4, fixed_abs, tag = 'smem constant byte address 0x4 - core index']
  #allocation1 [shape = 'u32[144,128]{1,0:T(1,128)}', space=vmem, size = 0x12000, scoped, tag = 'internal scratch']
  %s0 = inlined_call_operand.vmem [shape: bf16[2,36,256], index: 0, kind: input, shape index: {}]
  %s1 = inlined_call_operand.vmem [shape: bf16[2,36,256], index: 1, kind: input, shape index: {}]
  %s2 = inlined_call_operand.vmem [shape: bf16[2,36,256], index: 2, kind: input, shape index: {}]
  %s3 = inlined_call_operand.vmem [shape: bf16[2,36,256], index: 3, kind: input, shape index: {}]
  %s4 = inlined_call_operand.vmem [shape: bf16[2,9,256], index: 4, kind: input, shape index: {}]
  %s5 = inlined_call_operand.vmem [shape: bf16[2,9,256], index: 5, kind: input, shape index: {}]
  %s6 = inlined_call_operand.vmem [shape: bf16[8,36], index: 6, kind: input, shape index: {}]
  %s7 = inlined_call_operand.vmem [shape: f32[8,1], index: 7, kind: input, shape index: {}]
  %s8 = inlined_call_operand.vmem [shape: f32[2,8,256], index: 8, kind: output, shape index: {}]
  %s9 = sld [smem:[#allocation0]]
  $region65: #{deform_conv2d_pallas.1} parent=0
    _
  %s11 = ssub.s32 1, %s9
  %s12 = scalar_select 0, %s11, %s9
  loop: start=0, step=1, limit=4
  $region2: #{deform_conv2d_pallas.1} parent=0 // loop_pre_header
    _
  $region3: #{deform_conv2d_pallas.1} parent=0 // loop_header
    %s14 = sphi 0, %s18
    %p15 = scmp.ge.s32.totalorder %s14, 4
    %s21 = sphi 0, %s33
    %s22 = sphi 0, %s29
    %s23 = sphi 0, %s21
    %s24 = sphi 0, %s22
    %s25 = sphi 0, %s23
    %s26 = sphi 0, %s24
    %s38 = sphi 0, %s40
    %s41 = sphi 0, %s38
    %s42 = sphi 0, %s41
    %s58 = sphi 0, %s42
    %s66 = sphi 0, %s68
    %s69 = sphi 0, %s66
    %s70 = sphi 0, %s69
    %s86 = sphi 0, %s70
    %s94 = sphi 0, %s96
    %s97 = sphi 0, %s94
    %s98 = sphi 0, %s97
    %s114 = sphi 0, %s98
    %s122 = sphi 0, %s124
    %s125 = sphi 0, %s122
    %s126 = sphi 0, %s125
    %s142 = sphi 0, %s126
    %s150 = sphi 0, %s152
    %s153 = sphi 0, %s150
    %s154 = sphi 0, %s153
    %s170 = sphi 0, %s154
    %s178 = sphi 0, %s180
    %s181 = sphi 0, %s178
    %s182 = sphi 0, %s181
    %s198 = sphi 0, %s182
    %s202 = sphi 0, %s202
    %s204 = sphi 0, %s202
    %s205 = sphi 0, %s204
    %s219 = sphi 0, %s205
    %s223 = sphi 0, %s223
    %s225 = sphi 0, %s223
    %s226 = sphi 0, %s225
    %s240 = sphi 0, %s226
    %s248 = sphi 0, %s250
    %s251 = sphi 0, %s248
    %s252 = sphi 0, %s251
    %s268 = sphi 0, %s252
  $region4: #{deform_conv2d_pallas.1} parent=0 // loop_header_branch
    %17 = sbr.rel (%p15) target = $region8
  $region5: #{deform_conv2d_pallas.1} parent=0 // loop_body
    %s19 = ssub.s32 %s14, 1
    %s20 = ssub.s32 %s14, 2
    %s27 = sadd.s32 1, %s22
    %p28 = scmp.ge.s32.totalorder %s27, 1
    %s29 = scalar_select %p28, 0, %s27
    %s30 = sadd.s32 1, %s21
    %s31 = scalar_select %p28, %s30, %s21
    %p32 = scmp.ge.s32.totalorder %s31, 2
    %s33 = scalar_select %p32, 0, %s31
    %s34 = ssub.s32 %s21, %s33
    %s35 = ssub.s32 %s22, %s29
    %s36 = sor.u32 %s34, %s35
    %p37 = scmp.eq.s32.totalorder %s36, 0
    %s39 = sadd.s32 %s38, 1
    %s40 = scalar_select %p37, %s38, %s39
    %p43 = pneg %p37
    %p44 = scmp.eq.s32.totalorder %s14, 1
    %p45 = por %p43, %p44
    %p46 = scmp.ne.s32.totalorder %s38, %s41
    %p47 = scmp.eq.s32.totalorder %s14, 0
    %p48 = por %p46, %p47
    %p49 = scmp.ne.s32.totalorder %s38, %s41
    %p50 = scmp.eq.s32.totalorder %s19, 1
    %p51 = por %p49, %p50
    %p52 = scmp.ne.s32.totalorder %s41, %s42
    %p53 = scmp.eq.s32.totalorder %s19, 0
    %p54 = por %p52, %p53
    %p55 = scmp.ne.s32.totalorder %s41, %s42
    %p56 = scmp.eq.s32.totalorder %s20, 1
    %p57 = por %p55, %p56
    %p59 = scmp.ne.s32.totalorder %s42, %s58
    %p60 = scmp.eq.s32.totalorder %s20, 0
    %p61 = por %p59, %p60
    %s62 = ssub.s32 %s21, %s33
    %s63 = ssub.s32 %s22, %s29
    %s64 = sor.u32 %s62, %s63
    %p65 = scmp.eq.s32.totalorder %s64, 0
    %s67 = sadd.s32 %s66, 1
    %s68 = scalar_select %p65, %s66, %s67
    %p71 = pneg %p65
    %p72 = scmp.eq.s32.totalorder %s14, 1
    %p73 = por %p71, %p72
    %p74 = scmp.ne.s32.totalorder %s66, %s69
    %p75 = scmp.eq.s32.totalorder %s14, 0
    %p76 = por %p74, %p75
    %p77 = scmp.ne.s32.totalorder %s66, %s69
    %p78 = scmp.eq.s32.totalorder %s19, 1
    %p79 = por %p77, %p78
    %p80 = scmp.ne.s32.totalorder %s69, %s70
    %p81 = scmp.eq.s32.totalorder %s19, 0
    %p82 = por %p80, %p81
    %p83 = scmp.ne.s32.totalorder %s69, %s70
    %p84 = scmp.eq.s32.totalorder %s20, 1
    %p85 = por %p83, %p84
    %p87 = scmp.ne.s32.totalorder %s70, %s86
    %p88 = scmp.eq.s32.totalorder %s20, 0
    %p89 = por %p87, %p88
    %s90 = ssub.s32 %s21, %s33
    %s91 = ssub.s32 %s22, %s29
    %s92 = sor.u32 %s90, %s91
    %p93 = scmp.eq.s32.totalorder %s92, 0
    %s95 = sadd.s32 %s94, 1
    %s96 = scalar_select %p93, %s94, %s95
    %p99 = pneg %p93
    %p100 = scmp.eq.s32.totalorder %s14, 1
    %p101 = por %p99, %p100
    %p102 = scmp.ne.s32.totalorder %s94, %s97
    %p103 = scmp.eq.s32.totalorder %s14, 0
    %p104 = por %p102, %p103
    %p105 = scmp.ne.s32.totalorder %s94, %s97
    %p106 = scmp.eq.s32.totalorder %s19, 1
    %p107 = por %p105, %p106
    %p108 = scmp.ne.s32.totalorder %s97, %s98
    %p109 = scmp.eq.s32.totalorder %s19, 0
    %p110 = por %p108, %p109
    %p111 = scmp.ne.s32.totalorder %s97, %s98
    %p112 = scmp.eq.s32.totalorder %s20, 1
    %p113 = por %p111, %p112
    %p115 = scmp.ne.s32.totalorder %s98, %s114
    %p116 = scmp.eq.s32.totalorder %s20, 0
    %p117 = por %p115, %p116
    %s118 = ssub.s32 %s21, %s33
    %s119 = ssub.s32 %s22, %s29
    %s120 = sor.u32 %s118, %s119
    %p121 = scmp.eq.s32.totalorder %s120, 0
    %s123 = sadd.s32 %s122, 1
    %s124 = scalar_select %p121, %s122, %s123
    %p127 = pneg %p121
    %p128 = scmp.eq.s32.totalorder %s14, 1
    %p129 = por %p127, %p128
    %p130 = scmp.ne.s32.totalorder %s122, %s125
    %p131 = scmp.eq.s32.totalorder %s14, 0
    %p132 = por %p130, %p131
    %p133 = scmp.ne.s32.totalorder %s122, %s125
    %p134 = scmp.eq.s32.totalorder %s19, 1
    %p135 = por %p133, %p134
    %p136 = scmp.ne.s32.totalorder %s125, %s126
    %p137 = scmp.eq.s32.totalorder %s19, 0
    %p138 = por %p136, %p137
    %p139 = scmp.ne.s32.totalorder %s125, %s126
    %p140 = scmp.eq.s32.totalorder %s20, 1
    %p141 = por %p139, %p140
    %p143 = scmp.ne.s32.totalorder %s126, %s142
    %p144 = scmp.eq.s32.totalorder %s20, 0
    %p145 = por %p143, %p144
    %s146 = ssub.s32 %s21, %s33
    %s147 = ssub.s32 %s22, %s29
    %s148 = sor.u32 %s146, %s147
    %p149 = scmp.eq.s32.totalorder %s148, 0
    %s151 = sadd.s32 %s150, 1
    %s152 = scalar_select %p149, %s150, %s151
    %p155 = pneg %p149
    %p156 = scmp.eq.s32.totalorder %s14, 1
    %p157 = por %p155, %p156
    %p158 = scmp.ne.s32.totalorder %s150, %s153
    %p159 = scmp.eq.s32.totalorder %s14, 0
    %p160 = por %p158, %p159
    %p161 = scmp.ne.s32.totalorder %s150, %s153
    %p162 = scmp.eq.s32.totalorder %s19, 1
    %p163 = por %p161, %p162
    %p164 = scmp.ne.s32.totalorder %s153, %s154
    %p165 = scmp.eq.s32.totalorder %s19, 0
    %p166 = por %p164, %p165
    %p167 = scmp.ne.s32.totalorder %s153, %s154
    %p168 = scmp.eq.s32.totalorder %s20, 1
    %p169 = por %p167, %p168
    %p171 = scmp.ne.s32.totalorder %s154, %s170
    %p172 = scmp.eq.s32.totalorder %s20, 0
    %p173 = por %p171, %p172
    %s174 = ssub.s32 %s21, %s33
    %s175 = ssub.s32 %s22, %s29
    %s176 = sor.u32 %s174, %s175
    %p177 = scmp.eq.s32.totalorder %s176, 0
    %s179 = sadd.s32 %s178, 1
    %s180 = scalar_select %p177, %s178, %s179
    %p183 = pneg %p177
    %p184 = scmp.eq.s32.totalorder %s14, 1
    %p185 = por %p183, %p184
    %p186 = scmp.ne.s32.totalorder %s178, %s181
    %p187 = scmp.eq.s32.totalorder %s14, 0
    %p188 = por %p186, %p187
    %p189 = scmp.ne.s32.totalorder %s178, %s181
    %p190 = scmp.eq.s32.totalorder %s19, 1
    %p191 = por %p189, %p190
    %p192 = scmp.ne.s32.totalorder %s181, %s182
    %p193 = scmp.eq.s32.totalorder %s19, 0
    %p194 = por %p192, %p193
    %p195 = scmp.ne.s32.totalorder %s181, %s182
    %p196 = scmp.eq.s32.totalorder %s20, 1
    %p197 = por %p195, %p196
    %p199 = scmp.ne.s32.totalorder %s182, %s198
    %p200 = scmp.eq.s32.totalorder %s20, 0
    %p201 = por %p199, %p200
    %s203 = sadd.s32 %s202, 1
    %p206 = scmp.eq.s32.totalorder %s14, 1
    %p207 = scmp.ne.s32.totalorder %s202, %s204
    %p208 = scmp.eq.s32.totalorder %s14, 0
    %p209 = por %p207, %p208
    %p210 = scmp.ne.s32.totalorder %s202, %s204
    %p211 = scmp.eq.s32.totalorder %s19, 1
    %p212 = por %p210, %p211
    %p213 = scmp.ne.s32.totalorder %s204, %s205
    %p214 = scmp.eq.s32.totalorder %s19, 0
    %p215 = por %p213, %p214
    %p216 = scmp.ne.s32.totalorder %s204, %s205
    %p217 = scmp.eq.s32.totalorder %s20, 1
    %p218 = por %p216, %p217
    %p220 = scmp.ne.s32.totalorder %s205, %s219
    %p221 = scmp.eq.s32.totalorder %s20, 0
    %p222 = por %p220, %p221
    %s224 = sadd.s32 %s223, 1
    %p227 = scmp.eq.s32.totalorder %s14, 1
    %p228 = scmp.ne.s32.totalorder %s223, %s225
    %p229 = scmp.eq.s32.totalorder %s14, 0
    %p230 = por %p228, %p229
    %p231 = scmp.ne.s32.totalorder %s223, %s225
    %p232 = scmp.eq.s32.totalorder %s19, 1
    %p233 = por %p231, %p232
    %p234 = scmp.ne.s32.totalorder %s225, %s226
    %p235 = scmp.eq.s32.totalorder %s19, 0
    %p236 = por %p234, %p235
    %p237 = scmp.ne.s32.totalorder %s225, %s226
    %p238 = scmp.eq.s32.totalorder %s20, 1
    %p239 = por %p237, %p238
    %p241 = scmp.ne.s32.totalorder %s226, %s240
    %p242 = scmp.eq.s32.totalorder %s20, 0
    %p243 = por %p241, %p242
    %s244 = ssub.s32 %s21, %s33
    %s245 = ssub.s32 %s22, %s29
    %s246 = sor.u32 %s244, %s245
    %p247 = scmp.eq.s32.totalorder %s246, 0
    %s249 = sadd.s32 %s248, 1
    %s250 = scalar_select %p247, %s248, %s249
    %p253 = pneg %p247
    %p254 = scmp.eq.s32.totalorder %s14, 1
    %p255 = por %p253, %p254
    %p256 = scmp.ne.s32.totalorder %s248, %s251
    %p257 = scmp.eq.s32.totalorder %s14, 0
    %p258 = por %p256, %p257
    %p259 = scmp.ne.s32.totalorder %s248, %s251
    %p260 = scmp.eq.s32.totalorder %s19, 1
    %p261 = por %p259, %p260
    %p262 = scmp.ne.s32.totalorder %s251, %s252
    %p263 = scmp.eq.s32.totalorder %s19, 0
    %p264 = por %p262, %p263
    %p265 = scmp.ne.s32.totalorder %s251, %s252
    %p266 = scmp.eq.s32.totalorder %s20, 1
    %p267 = por %p265, %p266
    %p269 = scmp.ne.s32.totalorder %s252, %s268
    %p270 = scmp.eq.s32.totalorder %s20, 0
    %p271 = por %p269, %p270
    %p272 = scmp.le.s32.totalorder 1, %s14
    %p273 = scmp.lt.s32.totalorder %s14, 3
    %p274 = pnand %p272, %p273
    %p275 = pneg %p274
    // Predicated region
    $region9: #{deform_conv2d_pallas.1} parent=5 // pred_check
      _
    $region10: #{deform_conv2d_pallas.1} parent=5 // pred_check_branch
      %277 = sbr.rel (%p274) target = $region12
    $region11: #{deform_conv2d_pallas.1} parent=5 // pred_region
      %s278 = ssub.s32 %s14, 1
      // Predicated region
      $region13: #{deform_conv2d_pallas.1} parent=11 // pred_check
        %p279 = pneg %p215
      $region14: #{deform_conv2d_pallas.1} parent=11 // pred_check_branch
        %281 = sbr.rel (%p279) target = $region16
      $region15: #{deform_conv2d_pallas.1} parent=11 // pred_region
        _
      $region16: #{deform_conv2d_pallas.1} parent=11 // pred_fallthru
        _
      // Predicated region
      $region17: #{deform_conv2d_pallas.1} parent=11 // pred_check
        %p282 = pneg %p236
      $region18: #{deform_conv2d_pallas.1} parent=11 // pred_check_branch
        %284 = sbr.rel (%p282) target = $region20
      $region19: #{deform_conv2d_pallas.1} parent=11 // pred_region
        _
      $region20: #{deform_conv2d_pallas.1} parent=11 // pred_fallthru
        _
    $region12: #{deform_conv2d_pallas.1} parent=5 // pred_fallthru
      _
    %p285 = scmp.lt.s32.totalorder %s14, 2
    // Predicated region
    $region21: #{deform_conv2d_pallas.1} parent=5 // pred_check
      %p286 = pneg %p285
    $region22: #{deform_conv2d_pallas.1} parent=5 // pred_check_branch
      %288 = sbr.rel (%p286) target = $region24
    $region23: #{deform_conv2d_pallas.1} parent=5 // pred_region
      // Predicated region
      $region25: #{deform_conv2d_pallas.1} parent=23 // pred_check
        %p289 = pneg %p48
      $region26: #{deform_conv2d_pallas.1} parent=23 // pred_check_branch
        %291 = sbr.rel (%p289) target = $region28
      $region27: #{deform_conv2d_pallas.1} parent=23 // pred_region
        %s292 = smul.u32 2, %s22
        %p293 = scmp.lt.s32.totalorder %s21, 1
        %s294 = scalar_select %p293, %s21, 1
        %p295 = scmp.lt.s32.totalorder %s292, 1
        %s296 = scalar_select %p295, %s292, 1
        %s297 = smul.addr %s294, 10
        %s298 = sadd.s32 %s296, %s297
        %s299 = smul.addr %s298, 4
        %s300 = scalar_lea.vmem %s0, %s299
        %s301 = smul.u32 2, %s22
      $region28: #{deform_conv2d_pallas.1} parent=23 // pred_fallthru
        _
      // Predicated region
      $region29: #{deform_conv2d_pallas.1} parent=23 // pred_check
        %p302 = pneg %p76
      $region30: #{deform_conv2d_pallas.1} parent=23 // pred_check_branch
        %304 = sbr.rel (%p302) target = $region32
      $region31: #{deform_conv2d_pallas.1} parent=23 // pred_region
        %s305 = smul.u32 2, %s22
        %p306 = scmp.lt.s32.totalorder %s21, 1
        %s307 = scalar_select %p306, %s21, 1
        %p308 = scmp.lt.s32.totalorder %s305, 1
        %s309 = scalar_select %p308, %s305, 1
        %s310 = smul.addr %s307, 10
        %s311 = sadd.s32 %s309, %s310
        %s312 = smul.addr %s311, 4
        %s313 = scalar_lea.vmem %s1, %s312
        %s314 = smul.u32 2, %s22
      $region32: #{deform_conv2d_pallas.1} parent=23 // pred_fallthru
        _
      // Predicated region
      $region33: #{deform_conv2d_pallas.1} parent=23 // pred_check
        %p315 = pneg %p104
      $region34: #{deform_conv2d_pallas.1} parent=23 // pred_check_branch
        %317 = sbr.rel (%p315) target = $region36
      $region35: #{deform_conv2d_pallas.1} parent=23 // pred_region
        %s318 = smul.u32 2, %s22
        %p319 = scmp.lt.s32.totalorder %s21, 1
        %s320 = scalar_select %p319, %s21, 1
        %p321 = scmp.lt.s32.totalorder %s318, 1
        %s322 = scalar_select %p321, %s318, 1
        %s323 = smul.addr %s320, 10
        %s324 = sadd.s32 %s322, %s323
        %s325 = smul.addr %s324, 4
        %s326 = scalar_lea.vmem %s2, %s325
        %s327 = smul.u32 2, %s22
      $region36: #{deform_conv2d_pallas.1} parent=23 // pred_fallthru
        _
      // Predicated region
      $region37: #{deform_conv2d_pallas.1} parent=23 // pred_check
        %p328 = pneg %p132
      $region38: #{deform_conv2d_pallas.1} parent=23 // pred_check_branch
        %330 = sbr.rel (%p328) target = $region40
      $region39: #{deform_conv2d_pallas.1} parent=23 // pred_region
        %s331 = smul.u32 2, %s22
        %p332 = scmp.lt.s32.totalorder %s21, 1
        %s333 = scalar_select %p332, %s21, 1
        %p334 = scmp.lt.s32.totalorder %s331, 1
        %s335 = scalar_select %p334, %s331, 1
        %s336 = smul.addr %s333, 10
        %s337 = sadd.s32 %s335, %s336
        %s338 = smul.addr %s337, 4
        %s339 = scalar_lea.vmem %s3, %s338
        %s340 = smul.u32 2, %s22
      $region40: #{deform_conv2d_pallas.1} parent=23 // pred_fallthru
        _
      // Predicated region
      $region41: #{deform_conv2d_pallas.1} parent=23 // pred_check
        %p341 = pneg %p160
      $region42: #{deform_conv2d_pallas.1} parent=23 // pred_check_branch
        %343 = sbr.rel (%p341) target = $region44
      $region43: #{deform_conv2d_pallas.1} parent=23 // pred_region
        %s344 = smul.u32 2, %s22
        %p345 = scmp.lt.s32.totalorder %s21, 1
        %s346 = scalar_select %p345, %s21, 1
        %p347 = scmp.lt.s32.totalorder %s344, 1
        %s348 = scalar_select %p347, %s344, 1
        %s349 = smul.addr %s346, 4
        %s350 = sadd.s32 %s348, %s349
        %s351 = smul.addr %s350, 4
        %s352 = scalar_lea.vmem %s4, %s351
        %s353 = smul.u32 2, %s22
      $region44: #{deform_conv2d_pallas.1} parent=23 // pred_fallthru
        _
      // Predicated region
      $region45: #{deform_conv2d_pallas.1} parent=23 // pred_check
        %p354 = pneg %p188
      $region46: #{deform_conv2d_pallas.1} parent=23 // pred_check_branch
        %356 = sbr.rel (%p354) target = $region48
      $region47: #{deform_conv2d_pallas.1} parent=23 // pred_region
        %s357 = smul.u32 2, %s22
        %p358 = scmp.lt.s32.totalorder %s21, 1
        %s359 = scalar_select %p358, %s21, 1
        %p360 = scmp.lt.s32.totalorder %s357, 1
        %s361 = scalar_select %p360, %s357, 1
        %s362 = smul.addr %s359, 4
        %s363 = sadd.s32 %s361, %s362
        %s364 = smul.addr %s363, 4
        %s365 = scalar_lea.vmem %s5, %s364
        %s366 = smul.u32 2, %s22
      $region48: #{deform_conv2d_pallas.1} parent=23 // pred_fallthru
        _
    $region24: #{deform_conv2d_pallas.1} parent=5 // pred_fallthru
      _
    %p367 = scmp.le.s32.totalorder 1, %s14
    %p368 = scmp.lt.s32.totalorder %s14, 3
    %p369 = pnand %p367, %p368
    %p370 = pneg %p369
    // Predicated region
    $region49: #{deform_conv2d_pallas.1} parent=5 // pred_check
      _
    $region50: #{deform_conv2d_pallas.1} parent=5 // pred_check_branch
      %372 = sbr.rel (%p369) target = $region52
    $region51: #{deform_conv2d_pallas.1} parent=5 // pred_region
      %s373 = ssub.s32 %s14, 1
      %s374 = smul.u32 2, %s24
      %p375 = scmp.lt.s32.totalorder %s23, 1
      %s376 = scalar_select %p375, %s23, 1
      %p377 = scmp.lt.s32.totalorder %s374, 1
      %s378 = scalar_select %p377, %s374, 1
      %s379 = smul.addr %s376, 10
      %s380 = sadd.s32 %s378, %s379
      %s381 = smul.addr %s380, 4
      %s382 = scalar_lea.vmem %s0, %s381
      %p383 = pneg %p54
      %p384 = pneg %p51
      %s385 = smul.u32 2, %s24
      %p386 = scmp.lt.s32.totalorder %s23, 1
      %s387 = scalar_select %p386, %s23, 1
      %p388 = scmp.lt.s32.totalorder %s385, 1
      %s389 = scalar_select %p388, %s385, 1
      %s390 = smul.addr %s387, 10
      %s391 = sadd.s32 %s389, %s390
      %s392 = smul.addr %s391, 4
      %s393 = scalar_lea.vmem %s1, %s392
      %p394 = pneg %p82
      %p395 = pneg %p79
      %s396 = smul.u32 2, %s24
      %p397 = scmp.lt.s32.totalorder %s23, 1
      %s398 = scalar_select %p397, %s23, 1
      %p399 = scmp.lt.s32.totalorder %s396, 1
      %s400 = scalar_select %p399, %s396, 1
      %s401 = smul.addr %s398, 10
      %s402 = sadd.s32 %s400, %s401
      %s403 = smul.addr %s402, 4
      %s404 = scalar_lea.vmem %s2, %s403
      %p405 = pneg %p110
      %p406 = pneg %p107
      %s407 = smul.u32 2, %s24
      %p408 = scmp.lt.s32.totalorder %s23, 1
      %s409 = scalar_select %p408, %s23, 1
      %p410 = scmp.lt.s32.totalorder %s407, 1
      %s411 = scalar_select %p410, %s407, 1
      %s412 = smul.addr %s409, 10
      %s413 = sadd.s32 %s411, %s412
      %s414 = smul.addr %s413, 4
      %s415 = scalar_lea.vmem %s3, %s414
      %p416 = pneg %p138
      %p417 = pneg %p135
      %s418 = smul.u32 2, %s24
      %p419 = scmp.lt.s32.totalorder %s23, 1
      %s420 = scalar_select %p419, %s23, 1
      %p421 = scmp.lt.s32.totalorder %s418, 1
      %s422 = scalar_select %p421, %s418, 1
      %s423 = smul.addr %s420, 4
      %s424 = sadd.s32 %s422, %s423
      %s425 = smul.addr %s424, 4
      %s426 = scalar_lea.vmem %s4, %s425
      %p427 = pneg %p166
      %p428 = pneg %p163
      %s429 = smul.u32 2, %s24
      %p430 = scmp.lt.s32.totalorder %s23, 1
      %s431 = scalar_select %p430, %s23, 1
      %p432 = scmp.lt.s32.totalorder %s429, 1
      %s433 = scalar_select %p432, %s429, 1
      %s434 = smul.addr %s431, 4
      %s435 = sadd.s32 %s433, %s434
      %s436 = smul.addr %s435, 4
      %s437 = scalar_lea.vmem %s5, %s436
      %p438 = pneg %p194
      %p439 = pneg %p191
      %p440 = pneg %p215
      %p441 = pneg %p212
      %p442 = pneg %p236
      %p443 = pneg %p233
      %p444 = pneg %p264
      %p445 = pneg %p261
      %s446 = smul.u32 2, %s24
      %p447 = scmp.lt.s32.totalorder %s23, 1
      %s448 = scalar_select %p447, %s23, 1
      %p449 = scmp.lt.s32.totalorder %s446, 1
      %s450 = scalar_select %p449, %s446, 1
      %s451 = smul.addr %s448, 2
      %s452 = sadd.s32 %s450, %s451
      %s453 = smul.addr %s452, 8
      %s454 = scalar_lea.vmem %s8, %s453
      %s455 = smul.u32 2, %s24
      %p456 = scmp.lt.s32.totalorder %s23, 1
      %s457 = scalar_select %p456, %s23, 1
      %p458 = scmp.lt.s32.totalorder %s455, 1
      %s459 = scalar_select %p458, %s455, 1
      %s460 = smul.addr %s457, 10
      %s461 = sadd.s32 %s459, %s460
      %s462 = smul.addr %s461, 4
      %s463 = scalar_lea.vmem %s0, %s462
      %s464 = smul.u32 2, %s24
      %s465 = smul.u32 2, %s24
      %p466 = scmp.lt.s32.totalorder %s23, 1
      %s467 = scalar_select %p466, %s23, 1
      %p468 = scmp.lt.s32.totalorder %s465, 1
      %s469 = scalar_select %p468, %s465, 1
      %s470 = smul.addr %s467, 10
      %s471 = sadd.s32 %s469, %s470
      %s472 = smul.addr %s471, 4
      %s473 = scalar_lea.vmem %s1, %s472
      %s474 = smul.u32 2, %s24
      %s475 = smul.u32 2, %s24
      %p476 = scmp.lt.s32.totalorder %s23, 1
      %s477 = scalar_select %p476, %s23, 1
      %p478 = scmp.lt.s32.totalorder %s475, 1
      %s479 = scalar_select %p478, %s475, 1
      %s480 = smul.addr %s477, 10
      %s481 = sadd.s32 %s479, %s480
      %s482 = smul.addr %s481, 4
      %s483 = scalar_lea.vmem %s2, %s482
      %s484 = smul.u32 2, %s24
      %s485 = smul.u32 2, %s24
      %p486 = scmp.lt.s32.totalorder %s23, 1
      %s487 = scalar_select %p486, %s23, 1
      %p488 = scmp.lt.s32.totalorder %s485, 1
      %s489 = scalar_select %p488, %s485, 1
      %s490 = smul.addr %s487, 10
      %s491 = sadd.s32 %s489, %s490
      %s492 = smul.addr %s491, 4
      %s493 = scalar_lea.vmem %s3, %s492
      %s494 = smul.u32 2, %s24
      %s495 = smul.u32 2, %s24
      %p496 = scmp.lt.s32.totalorder %s23, 1
      %s497 = scalar_select %p496, %s23, 1
      %p498 = scmp.lt.s32.totalorder %s495, 1
      %s499 = scalar_select %p498, %s495, 1
      %s500 = smul.addr %s497, 4
      %s501 = sadd.s32 %s499, %s500
      %s502 = smul.addr %s501, 4
      %s503 = scalar_lea.vmem %s4, %s502
      %s504 = smul.u32 2, %s24
      %s505 = smul.u32 2, %s24
      %p506 = scmp.lt.s32.totalorder %s23, 1
      %s507 = scalar_select %p506, %s23, 1
      %p508 = scmp.lt.s32.totalorder %s505, 1
      %s509 = scalar_select %p508, %s505, 1
      %s510 = smul.addr %s507, 4
      %s511 = sadd.s32 %s509, %s510
      %s512 = smul.addr %s511, 4
      %s513 = scalar_lea.vmem %s5, %s512
      %s514 = smul.u32 2, %s24
      %s515 = smul.u32 2, %s24
      %p516 = scmp.lt.s32.totalorder %s23, 1
      %s517 = scalar_select %p516, %s23, 1
      %p518 = scmp.lt.s32.totalorder %s515, 1
      %s519 = scalar_select %p518, %s515, 1
      %s520 = smul.addr %s517, 2
      %s521 = sadd.s32 %s519, %s520
      %s522 = smul.addr %s521, 8
      %s523 = scalar_lea.vmem %s8, %s522
      %s524 = smul.u32 2, %s24
      %v526 = vld [vmem:[%s6] sm:$0xf]
      %v527 = vld [vmem:[%s7] sm:$0xff]
      %v528 = vld [vmem:[%s503] sm:$0xff]
      %v529 = vld [vmem:[%s503 + $0x8] sm:$0x11]
      %v530 = vunpack.c.l.bf16 %v528
      %v531 = vunpack.c.h.bf16 %v528
      %v532 = vunpack.c.l.bf16 %v529
      %v533 = vunpack.c.h.bf16 %v529
      %v534 = vld [vmem:[%s513] sm:$0xff]
      %v535 = vld [vmem:[%s513 + $0x8] sm:$0x11]
      %v536 = vunpack.c.l.bf16 %v534
      %v537 = vunpack.c.h.bf16 %v534
      %v538 = vunpack.c.l.bf16 %v535
      %v539 = vunpack.c.h.bf16 %v535
      %v540 = vsub.f32 1.0, %v530
      %v541 = vsub.f32 1.0, %v531
      %v542 = vsub.f32 1.0, %v532
      %v543 = vsub.f32 1.0, %v533
      %v544 = vsub.f32 1.0, %v536
      %v545 = vsub.f32 1.0, %v537
      %v546 = vsub.f32 1.0, %v538
      %v547 = vsub.f32 1.0, %v539
      %v548 = vmul.f32 %v544, %v540
      %v549 = vmul.f32 %v545, %v541
      %v550 = vmul.f32 %v546, %v542
      %v551 = vmul.f32 %v547, %v543
      %vm556 = vcmask 1040384
      %v557 = vrot.slane %v548, 7
      %v558 = vrot.slane %v549, 7
      %v559 = vrot.slane %v550, 7
      %v560 = vsel %vm556, %v557, %v559
      %v561 = vrot.slane %v551, 7
      %v562 = vsel %vm556, %v558, %v561
      %vm567 = vcmask 1041408
      %v568 = vrot.slane %v548, 6
      %v569 = vrot.slane %v549, 6
      %v570 = vrot.slane %v550, 6
      %v571 = vsel %vm567, %v568, %v570
      %v572 = vrot.slane %v551, 6
      %v573 = vsel %vm567, %v569, %v572
      %vm578 = vcmask 1042432
      %v579 = vrot.slane %v548, 5
      %v580 = vrot.slane %v549, 5
      %v581 = vrot.slane %v550, 5
      %v582 = vsel %vm578, %v579, %v581
      %v583 = vrot.slane %v551, 5
      %v584 = vsel %vm578, %v580, %v583
      %v589 = vsel %vm556, %v550, %v557
      %v590 = vsel %vm556, %v551, %v558
      %v591 = vsel %vm567, %v560, %v568
      %v592 = vsel %vm567, %v562, %v569
      %v593 = vsel %vm578, %v571, %v579
      %v594 = vsel %vm578, %v573, %v580
      %v595 = vld [vmem:[%s463] sm:$0xff]
      %v596 = vld [vmem:[%s463 + $0x8] sm:$0xff]
      %v597 = vld [vmem:[%s463 + $0x10] sm:$0xff]
      %v598 = vld [vmem:[%s463 + $0x18] sm:$0xff]
      %v599 = vld [vmem:[%s463 + $0x20] sm:$0x33]
      %v600 = vunpack.c.l.bf16 %v595
      %v601 = vunpack.c.h.bf16 %v595
      %v602 = vunpack.c.l.bf16 %v596
      %v603 = vunpack.c.h.bf16 %v596
      %v604 = vunpack.c.l.bf16 %v597
      %v605 = vunpack.c.h.bf16 %v597
      %v606 = vunpack.c.l.bf16 %v598
      %v607 = vunpack.c.h.bf16 %v598
      %v608 = vunpack.c.l.bf16 %v599
      %v609 = vunpack.c.h.bf16 %v599
      %v610 = vmul.f32 %v548, %v600
      %v611 = vmul.f32 %v549, %v601
      %v612 = vmul.f32 %v589, %v602
      %v613 = vmul.f32 %v590, %v603
      %v614 = vmul.f32 %v591, %v604
      %v615 = vmul.f32 %v592, %v605
      %v616 = vmul.f32 %v593, %v606
      %v617 = vmul.f32 %v594, %v607
      %v618 = vmul.f32 %v582, %v608
      %v619 = vmul.f32 %v584, %v609
      %v620 = vmul.f32 %v544, %v530
      %v621 = vmul.f32 %v545, %v531
      %v622 = vmul.f32 %v546, %v532
      %v623 = vmul.f32 %v547, %v533
      %v628 = vrot.slane %v620, 7
      %v629 = vrot.slane %v621, 7
      %v630 = vrot.slane %v622, 7
      %v631 = vsel %vm556, %v628, %v630
      %v632 = vrot.slane %v623, 7
      %v633 = vsel %vm556, %v629, %v632
      %v638 = vrot.slane %v620, 6
      %v639 = vrot.slane %v621, 6
      %v640 = vrot.slane %v622, 6
      %v641 = vsel %vm567, %v638, %v640
      %v642 = vrot.slane %v623, 6
      %v643 = vsel %vm567, %v639, %v642
      %v648 = vrot.slane %v620, 5
      %v649 = vrot.slane %v621, 5
      %v650 = vrot.slane %v622, 5
      %v651 = vsel %vm578, %v648, %v650
      %v652 = vrot.slane %v623, 5
      %v653 = vsel %vm578, %v649, %v652
      %v658 = vsel %vm556, %v622, %v628
      %v659 = vsel %vm556, %v623, %v629
      %v660 = vsel %vm567, %v631, %v638
      %v661 = vsel %vm567, %v633, %v639
      %v662 = vsel %vm578, %v641, %v648
      %v663 = vsel %vm578, %v643, %v649
      %v664 = vld [vmem:[%s473] sm:$0xff]
      %v665 = vld [vmem:[%s473 + $0x8] sm:$0xff]
      %v666 = vld [vmem:[%s473 + $0x10] sm:$0xff]
      %v667 = vld [vmem:[%s473 + $0x18] sm:$0xff]
      %v668 = vld [vmem:[%s473 + $0x20] sm:$0x33]
      %v669 = vunpack.c.l.bf16 %v664
      %v670 = vunpack.c.h.bf16 %v664
      %v671 = vunpack.c.l.bf16 %v665
      %v672 = vunpack.c.h.bf16 %v665
      %v673 = vunpack.c.l.bf16 %v666
      %v674 = vunpack.c.h.bf16 %v666
      %v675 = vunpack.c.l.bf16 %v667
      %v676 = vunpack.c.h.bf16 %v667
      %v677 = vunpack.c.l.bf16 %v668
      %v678 = vunpack.c.h.bf16 %v668
      %v679 = vmul.f32 %v620, %v669
      %v680 = vmul.f32 %v621, %v670
      %v681 = vmul.f32 %v658, %v671
      %v682 = vmul.f32 %v659, %v672
      %v683 = vmul.f32 %v660, %v673
      %v684 = vmul.f32 %v661, %v674
      %v685 = vmul.f32 %v662, %v675
      %v686 = vmul.f32 %v663, %v676
      %v687 = vmul.f32 %v651, %v677
      %v688 = vmul.f32 %v653, %v678
      %v689 = vadd.f32 %v610, %v679
      %v690 = vadd.f32 %v611, %v680
      %v691 = vadd.f32 %v612, %v681
      %v692 = vadd.f32 %v613, %v682
      %v693 = vadd.f32 %v614, %v683
      %v694 = vadd.f32 %v615, %v684
      %v695 = vadd.f32 %v616, %v685
      %v696 = vadd.f32 %v617, %v686
      %v697 = vadd.f32 %v618, %v687
      %v698 = vadd.f32 %v619, %v688
      %v699 = vmul.f32 %v536, %v540
      %v700 = vmul.f32 %v537, %v541
      %v701 = vmul.f32 %v538, %v542
      %v702 = vmul.f32 %v539, %v543
      %v707 = vrot.slane %v699, 7
      %v708 = vrot.slane %v700, 7
      %v709 = vrot.slane %v701, 7
      %v710 = vsel %vm556, %v707, %v709
      %v711 = vrot.slane %v702, 7
      %v712 = vsel %vm556, %v708, %v711
      %v717 = vrot.slane %v699, 6
      %v718 = vrot.slane %v700, 6
      %v719 = vrot.slane %v701, 6
      %v720 = vsel %vm567, %v717, %v719
      %v721 = vrot.slane %v702, 6
      %v722 = vsel %vm567, %v718, %v721
      %v727 = vrot.slane %v699, 5
      %v728 = vrot.slane %v700, 5
      %v729 = vrot.slane %v701, 5
      %v730 = vsel %vm578, %v727, %v729
      %v731 = vrot.slane %v702, 5
      %v732 = vsel %vm578, %v728, %v731
      %v737 = vsel %vm556, %v701, %v707
      %v738 = vsel %vm556, %v702, %v708
      %v739 = vsel %vm567, %v710, %v717
      %v740 = vsel %vm567, %v712, %v718
      %v741 = vsel %vm578, %v720, %v727
      %v742 = vsel %vm578, %v722, %v728
      %v743 = vld [vmem:[%s483] sm:$0xff]
      %v744 = vld [vmem:[%s483 + $0x8] sm:$0xff]
      %v745 = vld [vmem:[%s483 + $0x10] sm:$0xff]
      %v746 = vld [vmem:[%s483 + $0x18] sm:$0xff]
      %v747 = vld [vmem:[%s483 + $0x20] sm:$0x33]
      %v748 = vunpack.c.l.bf16 %v743
      %v749 = vunpack.c.h.bf16 %v743
      %v750 = vunpack.c.l.bf16 %v744
      %v751 = vunpack.c.h.bf16 %v744
      %v752 = vunpack.c.l.bf16 %v745
      %v753 = vunpack.c.h.bf16 %v745
      %v754 = vunpack.c.l.bf16 %v746
      %v755 = vunpack.c.h.bf16 %v746
      %v756 = vunpack.c.l.bf16 %v747
      %v757 = vunpack.c.h.bf16 %v747
      %v758 = vmul.f32 %v699, %v748
      %v759 = vmul.f32 %v700, %v749
      %v760 = vmul.f32 %v737, %v750
      %v761 = vmul.f32 %v738, %v751
      %v762 = vmul.f32 %v739, %v752
      %v763 = vmul.f32 %v740, %v753
      %v764 = vmul.f32 %v741, %v754
      %v765 = vmul.f32 %v742, %v755
      %v766 = vmul.f32 %v730, %v756
      %v767 = vmul.f32 %v732, %v757
      %v768 = vadd.f32 %v689, %v758
      %v769 = vadd.f32 %v690, %v759
      %v770 = vadd.f32 %v691, %v760
      %v771 = vadd.f32 %v692, %v761
      %v772 = vadd.f32 %v693, %v762
      %v773 = vadd.f32 %v694, %v763
      %v774 = vadd.f32 %v695, %v764
      %v775 = vadd.f32 %v696, %v765
      %v776 = vadd.f32 %v697, %v766
      %v777 = vadd.f32 %v698, %v767
      %v778 = vmul.f32 %v536, %v530
      %v779 = vmul.f32 %v537, %v531
      %v780 = vmul.f32 %v538, %v532
      %v781 = vmul.f32 %v539, %v533
      %v786 = vrot.slane %v778, 7
      %v787 = vrot.slane %v779, 7
      %v788 = vrot.slane %v780, 7
      %v789 = vsel %vm556, %v786, %v788
      %v790 = vrot.slane %v781, 7
      %v791 = vsel %vm556, %v787, %v790
      %v796 = vrot.slane %v778, 6
      %v797 = vrot.slane %v779, 6
      %v798 = vrot.slane %v780, 6
      %v799 = vsel %vm567, %v796, %v798
      %v800 = vrot.slane %v781, 6
      %v801 = vsel %vm567, %v797, %v800
      %v806 = vrot.slane %v778, 5
      %v807 = vrot.slane %v779, 5
      %v808 = vrot.slane %v780, 5
      %v809 = vsel %vm578, %v806, %v808
      %v810 = vrot.slane %v781, 5
      %v811 = vsel %vm578, %v807, %v810
      %v816 = vsel %vm556, %v780, %v786
      %v817 = vsel %vm556, %v781, %v787
      %v818 = vsel %vm567, %v789, %v796
      %v819 = vsel %vm567, %v791, %v797
      %v820 = vsel %vm578, %v799, %v806
      %v821 = vsel %vm578, %v801, %v807
      %v822 = vld [vmem:[%s493] sm:$0xff]
      %v823 = vld [vmem:[%s493 + $0x8] sm:$0xff]
      %v824 = vld [vmem:[%s493 + $0x10] sm:$0xff]
      %v825 = vld [vmem:[%s493 + $0x18] sm:$0xff]
      %v826 = vld [vmem:[%s493 + $0x20] sm:$0x33]
      %v827 = vunpack.c.l.bf16 %v822
      %v828 = vunpack.c.h.bf16 %v822
      %v829 = vunpack.c.l.bf16 %v823
      %v830 = vunpack.c.h.bf16 %v823
      %v831 = vunpack.c.l.bf16 %v824
      %v832 = vunpack.c.h.bf16 %v824
      %v833 = vunpack.c.l.bf16 %v825
      %v834 = vunpack.c.h.bf16 %v825
      %v835 = vunpack.c.l.bf16 %v826
      %v836 = vunpack.c.h.bf16 %v826
      %v837 = vmul.f32 %v778, %v827
      %v838 = vmul.f32 %v779, %v828
      %v839 = vmul.f32 %v816, %v829
      %v840 = vmul.f32 %v817, %v830
      %v841 = vmul.f32 %v818, %v831
      %v842 = vmul.f32 %v819, %v832
      %v843 = vmul.f32 %v820, %v833
      %v844 = vmul.f32 %v821, %v834
      %v845 = vmul.f32 %v809, %v835
      %v846 = vmul.f32 %v811, %v836
      %v847 = vadd.f32 %v768, %v837
      %v848 = vadd.f32 %v769, %v838
      %v849 = vadd.f32 %v770, %v839
      %v850 = vadd.f32 %v771, %v840
      %v851 = vadd.f32 %v772, %v841
      %v852 = vadd.f32 %v773, %v842
      %v853 = vadd.f32 %v774, %v843
      %v854 = vadd.f32 %v775, %v844
      %v855 = vadd.f32 %v776, %v845
      %v856 = vadd.f32 %v777, %v846
      %v857 = vpack.c.bf16 %v849, %v847
      %v858 = vpack.c.bf16 %v850, %v848
      %v859 = vpack.c.bf16 %v853, %v851
      %v860 = vpack.c.bf16 %v854, %v852
      %v861 = vpack.c.bf16 %v855, %v855
      %v862 = vpack.c.bf16 %v856, %v856
      %864 = vset.pattern.permute.xlu0 0
      %865 = vperm.xlu0 %864, %v527
      %v866 = vpop.permute.xlu0 %865
      %vm868 = vcmask 293888
      %v870 = vsel %vm868, %v526, 0
      %v873 = vsel %vm567, %v861, 0
      %v876 = vsel %vm567, %v862, 0
      %878 = vmatprep.subr.bf16.mxu0 %v858
      %879 = vmatpush1.bf16.msra.mxu0 %v857
      %880 = vmatprep.subr.bf16.mxu0 %v860
      %881 = vmatpush1.bf16.msra.mxu0 %v859
      %882 = vmatprep.subr.bf16.mxu0 %v876
      %883 = vmatpush1.bf16.msra.mxu0 %v873
      %884 = vmatprep.subr.bf16.mxu0 0
      %885 = vmatpush1.bf16.msra.mxu0 0
      %886 = vmatprep.subr.bf16.mxu0 0
      %887 = vmatpush1.bf16.msra.mxu0 0
      %888 = vmatprep.subr.bf16.mxu0 0
      %889 = vmatpush1.bf16.msra.mxu0 0
      %890 = vmatprep.subr.bf16.mxu0 0
      %891 = vmatpush1.bf16.msra.mxu0 0
      %892 = vmatprep.subr.bf16.mxu0 0
      %893 = vmatpush1.bf16.msra.mxu0 0
      %894 = vmatprep.subr.bf16.mxu0 0
      %895 = vmatpush1.bf16.msra.mxu0 0
      %896 = vmatprep.subr.bf16.mxu0 0
      %897 = vmatpush1.bf16.msra.mxu0 0
      %898 = vmatprep.subr.bf16.mxu0 0
      %899 = vmatpush1.bf16.msra.mxu0 0
      %900 = vmatprep.subr.bf16.mxu0 0
      %901 = vmatpush1.bf16.msra.mxu0 0
      %902 = vmatprep.subr.bf16.mxu0 0
      %903 = vmatpush1.bf16.msra.mxu0 0
      %904 = vmatprep.subr.bf16.mxu0 0
      %905 = vmatpush1.bf16.msra.mxu0 0
      %906 = vmatprep.subr.bf16.mxu0 0
      %907 = vmatpush1.bf16.msra.mxu0 0
      %908 = vmatprep.subr.bf16.mxu0 0
      %909 = vmatpush1.bf16.msra.mxu0 0
      %910 = vmatprep.mubr.bf16.mxu0 0
      %911 = vmatmul.mubr.bf16.gmra.mrb[0].mxu0 %v870
      %v912 = vpop.f32.mrb[0].mxu0
      %v913 = vadd.f32 %v866, %v912
      %v914 = vpop.f32.mrb[0].mxu0
      %v915 = vadd.f32 %v866, %v914
      %v916 = vpop.f32.mrb[0].mxu0
      %v917 = vpop.f32.mrb[0].mxu0
      %918 = vdwg.mxu0
      %919 = vst [vmem:[%s523] sm:$0xff] %v913
      %920 = vst [vmem:[%s523 + $0x8] sm:$0xff] %v915
      %s921 = smul.u32 2, %s24
      %p922 = scmp.lt.s32.totalorder %s23, 1
      %s923 = scalar_select %p922, %s23, 1
      %p924 = scmp.lt.s32.totalorder %s921, 1
      %s925 = scalar_select %p924, %s921, 1
      %s926 = smul.addr %s923, 2
      %s927 = sadd.s32 %s925, %s926
      %s928 = smul.addr %s927, 8
      %s929 = scalar_lea.vmem %s8, %s928
      // Predicated region
      $region53: #{deform_conv2d_pallas.1} parent=51 // pred_check
        %p930 = pneg %p261
      $region54: #{deform_conv2d_pallas.1} parent=51 // pred_check_branch
        %932 = sbr.rel (%p930) target = $region56
      $region55: #{deform_conv2d_pallas.1} parent=51 // pred_region
        %s933 = smul.u32 2, %s24
      $region56: #{deform_conv2d_pallas.1} parent=51 // pred_fallthru
        _
    $region52: #{deform_conv2d_pallas.1} parent=5 // pred_fallthru
      _
    %p934 = scmp.le.s32.totalorder 2, %s14
    // Predicated region
    $region57: #{deform_conv2d_pallas.1} parent=5 // pred_check
      %p935 = pneg %p934
    $region58: #{deform_conv2d_pallas.1} parent=5 // pred_check_branch
      %937 = sbr.rel (%p935) target = $region60
    $region59: #{deform_conv2d_pallas.1} parent=5 // pred_region
      %s938 = ssub.s32 %s14, 2
      // Predicated region
      $region61: #{deform_conv2d_pallas.1} parent=59 // pred_check
        %p939 = pneg %p267
      $region62: #{deform_conv2d_pallas.1} parent=59 // pred_check_branch
        %941 = sbr.rel (%p939) target = $region64
      $region63: #{deform_conv2d_pallas.1} parent=59 // pred_region
        %s942 = smul.u32 2, %s26
        %p943 = scmp.lt.s32.totalorder %s25, 1
        %s944 = scalar_select %p943, %s25, 1
        %p945 = scmp.lt.s32.totalorder %s942, 1
        %s946 = scalar_select %p945, %s942, 1
        %s947 = smul.addr %s944, 2
        %s948 = sadd.s32 %s946, %s947
        %s949 = smul.addr %s948, 8
        %s950 = scalar_lea.vmem %s8, %s949
      $region64: #{deform_conv2d_pallas.1} parent=59 // pred_fallthru
        _
    $region60: #{deform_conv2d_pallas.1} parent=5 // pred_fallthru
      _
  $region6: #{deform_conv2d_pallas.1} parent=0 // loop_footer
    %s18 = sadd.s32 1, %s14
  $region7: #{deform_conv2d_pallas.1} parent=0 // loop_footer_branch
    %13 = sbr.rel target = $region3
  $region8: #{deform_conv2d_pallas.1} parent=0 // loop_exit
    _

</llo_original>
